<compile_context>
chip_gen: v6e
topology: v6e:2x2x1
jax: 0.10.0
libtpu: 0.0.40
codegen_flags: <defaults>
</compile_context>

<pallas_src>
import functools

import jax
import jax.numpy as jnp
import numpy as np
from jax.experimental import pallas as pl
from jax.experimental.pallas import tpu as pltpu

EPS = 1e-5
MATMUL_DTYPE = jnp.bfloat16       # MXU operand dtype; accumulation/epilogue stay f32
TM_DEFAULT = 512                  # row tile over M = N*Ho*Wo (v7x-safe with tn<=512)
TN_MAX = 512                      # Cout is only split when it exceeds this
VMEM_LIMIT_BYTES = 64 * 1024 * 1024


# ----------------------------- Pallas kernels ------------------------------ #
# BN scale is pre-folded into the weights, so the epilogue is bias (+res) + relu.

def conv_bn_relu_kernel(x_ref, w_ref, b_ref, o_ref):
    # x: (TM, 9*Cin) bf16, w: (9*Cin, TN) bf16 (scale-folded), b: (1, TN) f32
    acc = jnp.dot(x_ref[...], w_ref[...], preferred_element_type=jnp.float32)
    o_ref[...] = jnp.maximum(acc + b_ref[...], 0.0).astype(o_ref.dtype)


def conv_bn_addres_relu_kernel(x_ref, w_ref, b_ref, r_ref, o_ref):
    # identity shortcut: r_ref is the (TM, TN) residual tile
    acc = jnp.dot(x_ref[...], w_ref[...], preferred_element_type=jnp.float32)
    y = acc + b_ref[...] + r_ref[...].astype(jnp.float32)
    o_ref[...] = jnp.maximum(y, 0.0).astype(o_ref.dtype)


def conv_bn_add1x1_relu_kernel(x_ref, w_ref, b_ref, xs_ref, ws_ref, o_ref):
    # projection shortcut fused in: extra (TM, Cin) @ (Cin, TN) dot; both BN
    # scales are folded into w/ws and both biases are pre-summed into b_ref.
    y = jnp.dot(x_ref[...], w_ref[...], preferred_element_type=jnp.float32)
    y = y + jnp.dot(xs_ref[...], ws_ref[...], preferred_element_type=jnp.float32)
    y = y + b_ref[...]
    o_ref[...] = jnp.maximum(y, 0.0).astype(o_ref.dtype)


# ------------------------------ call wrapper -------------------------------- #

def _launch(kernel, args, kinds, m, cout, tm, tn, out_dtype):
    """Tiled fused matmul + epilogue launch.

    Grid is (Cout tiles, M tiles): the Cout axis is the OUTER (slow) axis, so the
    weight / bias blocks (kind 'c', index (0, j)) stay constant -- and therefore
    VMEM-resident -- across the entire inner sweep over M.

    kinds[i]: 'r'  -> tiled over M rows    (block (tm, fullK), idx (i, 0))
              'c'  -> tiled over Cout cols (block (fullK, tn), idx (0, j))
              'rc' -> tiled over both      (block (tm, tn),    idx (i, j))
    """
    grid = (pl.cdiv(cout, tn), pl.cdiv(m, tm))

    def spec(a, kind):
        if kind == "r":
            return pl.BlockSpec((tm, a.shape[1]), lambda j, i: (i, 0))
        if kind == "c":
            return pl.BlockSpec((a.shape[0], tn), lambda j, i: (0, j))
        return pl.BlockSpec((tm, tn), lambda j, i: (i, j))

    return pl.pallas_call(
        kernel,
        out_shape=jax.ShapeDtypeStruct((m, cout), out_dtype),
        grid=grid,
        in_specs=[spec(a, k) for a, k in zip(args, kinds)],
        out_specs=pl.BlockSpec((tm, tn), lambda j, i: (i, j)),
        compiler_params=pltpu.CompilerParams(
            dimension_semantics=("parallel", "parallel"),
            vmem_limit_bytes=VMEM_LIMIT_BYTES),
    )(*args)


def _round_up(x, m):
    return ((x + m - 1) // m) * m


def _row_tile(m):
    # tile must be a multiple of 8 (sublane); Pallas masks the partial edge block.
    return min(TM_DEFAULT, _round_up(m, 8))


def _col_tile(cout):
    # never split Cout <= 512 so weights/bias are fetched exactly once per conv
    if cout > TN_MAX and cout % TN_MAX == 0:
        return TN_MAX
    return cout


def _im2col_3x3(x_nhwc, stride):
    """3x3 patches of the zero-padded NHWC input -> (N*Ho*Wo, 9*C), tap-major.

    Dtype-preserving: feed it bf16 so the 9x blow-up is materialized in bf16.
    TODO(synk): replace with in-kernel patch assembly from a haloed VMEM block.
    """
    N, H, W, C = x_nhwc.shape
    xp = jnp.pad(x_nhwc, ((0, 0), (1, 1), (1, 1), (0, 0)))
    Ho = (H - 1) // stride + 1
    Wo = (W - 1) // stride + 1
    taps = []
    for ky in range(3):
        for kx in range(3):
            taps.append(xp[:, ky:ky + stride * (Ho - 1) + 1:stride,
                              kx:kx + stride * (Wo - 1) + 1:stride, :])
    patches = jnp.concatenate(taps, axis=-1)              # (N, Ho, Wo, 9*C)
    return patches.reshape(N * Ho * Wo, 9 * C), (N, Ho, Wo)


def fold_bn_into_weights(w2d, conv_bias, gamma, beta, running_mean, running_var):
    """Fold inference-mode BN into the conv: returns (scale-folded bf16 weights,
    f32 bias row).  w2d: (K, Cout)."""
    scale = gamma / jnp.sqrt(running_var + EPS)
    w_folded = (w2d.astype(jnp.float32) * scale).astype(MATMUL_DTYPE)
    bias = scale * (conv_bias - running_mean) + beta
    return w_folded, bias.reshape(1, -1).astype(jnp.float32)


@functools.partial(jax.jit, static_argnames=("stride",))
def residual_block_forward(x_nchw, p, stride):
    """Pallas-backed ResidualBlock forward (inference-mode BN).  NCHW in/out."""
    # NCHW -> NHWC once.  TODO(synk): keep activations NHWC across blocks to
    # drop this transpose pair entirely.
    x_f32 = jnp.transpose(x_nchw, (0, 2, 3, 1)).astype(jnp.float32)   # NHWC f32
    x = x_f32.astype(MATMUL_DTYPE)                                    # NHWC bf16
    N, H, W, Cin = x.shape
    Cout = p["w1"].shape[-1]

    w1, b1 = fold_bn_into_weights(p["w1"].reshape(9 * Cin, Cout),
                                  p["b1"], p["g1"], p["be1"], p["m1"], p["v1"])
    w2, b2 = fold_bn_into_weights(p["w2"].reshape(9 * Cout, Cout),
                                  p["b2"], p["g2"], p["be2"], p["m2"], p["v2"])

    # ---- conv1 (3x3, stride) + bn1 + relu : one fused K=9*Cin bf16 matmul ----
    patches1, (_, Ho, Wo) = _im2col_3x3(x, stride)        # bf16 patches
    M = N * Ho * Wo
    tm = _row_tile(M)
    tn = _col_tile(Cout)
    out1 = _launch(conv_bn_relu_kernel, [patches1, w1, b1],
                   ["r", "c", "c"], M, Cout, tm, tn,
                   out_dtype=MATMUL_DTYPE)                 # bf16: feeds conv2 only

    # ---- conv2 (3x3, stride 1) + bn2 + shortcut + relu, all fused ----
    patches2, _ = _im2col_3x3(out1.reshape(N, Ho, Wo, Cout), 1)   # already bf16
    if p["w_sc"] is not None:
        wsc, bsc = fold_bn_into_weights(p["w_sc"], p["b_sc"], p["g_sc"],
                                        p["be_sc"], p["m_sc"], p["v_sc"])
        xsc = x[:, ::stride, ::stride, :].reshape(M, Cin)          # bf16
        out = _launch(conv_bn_add1x1_relu_kernel,
                      [patches2, w2, b2 + bsc, xsc, wsc],
                      ["r", "c", "c", "r", "c"],
                      M, Cout, tm, tn, out_dtype=jnp.float32)
    else:
        res = x_f32.reshape(M, Cout)            # stride==1 and Cin==Cout here
        out = _launch(conv_bn_addres_relu_kernel,
                      [patches2, w2, b2, res],
                      ["r", "c", "c", "rc"],
                      M, Cout, tm, tn, out_dtype=jnp.float32)

    out = out.reshape(N, Ho, Wo, Cout)
    return jnp.transpose(out, (0, 3, 1, 2))                # -> NCHW


# ------------------------------ reference (JAX) ----------------------------- #

def ref_forward(x_nchw, p, stride):
    x = jnp.transpose(x_nchw, (0, 2, 3, 1))
    dn = ("NHWC", "HWIO", "NHWC")

    def conv(x, w, b, s, pad):
        y = jax.lax.conv_general_dilated(x, w, (s, s), pad, dimension_numbers=dn)
        return y + b

    def bn(y, g, be, m, v):
        return (y - m) / jnp.sqrt(v + EPS) * g + be

    o = jax.nn.relu(bn(conv(x, p["w1"], p["b1"], stride, [(1, 1), (1, 1)]),
                       p["g1"], p["be1"], p["m1"], p["v1"]))
    o2 = bn(conv(o, p["w2"], p["b2"], 1, [(1, 1), (1, 1)]),
            p["g2"], p["be2"], p["m2"], p["v2"])
    if p["w_sc"] is not None:
        wsc = p["w_sc"].reshape(1, 1, *p["w_sc"].shape)
        sc = bn(conv(x, wsc, p["b_sc"], stride, [(0, 0), (0, 0)]),
                p["g_sc"], p["be_sc"], p["m_sc"], p["v_sc"])
    else:
        sc = x
    return jnp.transpose(jax.nn.relu(o2 + sc), (0, 3, 1, 2))


# ----------------------------------- main ----------------------------------- #

def make_params(key, cin, cout, stride):
    ks = jax.random.split(key, 12)
    p = {
        "w1": 0.1 * jax.random.normal(ks[0], (3, 3, cin, cout), jnp.float32),
        "b1": 0.1 * jax.random.normal(ks[1], (cout,), jnp.float32),
        "g1": 1.0 + 0.1 * jax.random.normal(ks[2], (cout,), jnp.float32),
        "be1": 0.1 * jax.random.normal(ks[3], (cout,), jnp.float32),
        "m1": 0.1 * jax.random.normal(ks[4], (cout,), jnp.float32),
        "v1": 1.0 + 0.1 * jax.random.uniform(ks[5], (cout,), jnp.float32),
        "w2": 0.1 * jax.random.normal(ks[6], (3, 3, cout, cout), jnp.float32),
        "b2": 0.1 * jax.random.normal(ks[7], (cout,), jnp.float32),
        "g2": 1.0 + 0.1 * jax.random.normal(ks[8], (cout,), jnp.float32),
        "be2": 0.1 * jax.random.normal(ks[9], (cout,), jnp.float32),
        "m2": 0.1 * jax.random.normal(ks[10], (cout,), jnp.float32),
        "v2": 1.0 + 0.1 * jax.random.uniform(ks[11], (cout,), jnp.float32),
    }
    if stride != 1 or cin != cout:
        ks2 = jax.random.split(jax.random.fold_in(key, 99), 6)
        p.update({
            "w_sc": 0.1 * jax.random.normal(ks2[0], (cin, cout), jnp.float32),
            "b_sc": 0.1 * jax.random.normal(ks2[1], (cout,), jnp.float32),
            "g_sc": 1.0 + 0.1 * jax.random.normal(ks2[2], (cout,), jnp.float32),
            "be_sc": 0.1 * jax.random.normal(ks2[3], (cout,), jnp.float32),
            "m_sc": 0.1 * jax.random.normal(ks2[4], (cout,), jnp.float32),
            "v_sc": 1.0 + 0.1 * jax.random.uniform(ks2[5], (cout,), jnp.float32),
        })
    else:
        p["w_sc"] = None
    return p


def _run_case(key, n, cin, cout, h, w, stride):
    x = jax.random.normal(jax.random.fold_in(key, 1), (n, cin, h, w), jnp.float32)
    p = make_params(jax.random.fold_in(key, 2), cin, cout, stride)
    out = jax.block_until_ready(residual_block_forward(x, p, stride))
    ref = jax.block_until_ready(ref_forward(x, p, stride))
    ho = (h - 1) // stride + 1
    wo = (w - 1) // stride + 1
    assert out.shape == (n, cout, ho, wo), out.shape
    # bf16 MXU operands -> relaxed tolerance vs f32 XLA reference
    np.testing.assert_allclose(np.asarray(out), np.asarray(ref), rtol=2e-2, atol=2e-2)


if __name__ == "__main__":
    key = jax.random.PRNGKey(0)
    # 1) projection-shortcut path (stride 2, channel expansion)
    _run_case(jax.random.fold_in(key, 0), n=2, cin=4, cout=8, h=16, w=16, stride=2)
    # 2) identity-shortcut path (stride 1, same channel count)
    _run_case(jax.random.fold_in(key, 1), n=2, cin=8, cout=8, h=16, w=16, stride=1)
    print("KERNEL_OK")
</pallas_src>

<mosaic_0001>
module attributes {stable_mosaic.version = 11 : i64} {
  func.func @conv_bn_relu_kernel(%arg0: i32, %arg1: i32, %arg2: memref<128x36xbf16, #tpu.memory_space<vmem>>, %arg3: memref<36x8xbf16, #tpu.memory_space<vmem>>, %arg4: memref<1x8xf32, #tpu.memory_space<vmem>>, %arg5: memref<128x8xbf16, #tpu.memory_space<vmem>>) attributes {dimension_semantics = [#tpu.dimension_semantics<parallel>, #tpu.dimension_semantics<parallel>], iteration_bounds = array<i64: 1, 1>, scalar_prefetch = 0 : i64, scratch_operands = 0 : i64, tpu.core_type = #tpu.core_type<tc>, window_params = [{transform_indices = @transform_0, window_bounds = array<i64: 128, 36>}, {transform_indices = @transform_1, window_bounds = array<i64: 36, 8>}, {transform_indices = @transform_2, window_bounds = array<i64: 1, 8>}, {transform_indices = @transform_3, window_bounds = array<i64: 128, 8>}]} {
    %c0 = arith.constant 0 : index
    %c0_0 = arith.constant 0 : index
    %0 = vector.load %arg2[%c0, %c0_0] : memref<128x36xbf16, #tpu.memory_space<vmem>>, vector<128x36xbf16>
    %c0_1 = arith.constant 0 : index
    %c0_2 = arith.constant 0 : index
    %1 = vector.load %arg3[%c0_1, %c0_2] : memref<36x8xbf16, #tpu.memory_space<vmem>>, vector<36x8xbf16>
    %cst = arith.constant dense<0.000000e+00> : vector<128x8xf32>
    %2 = tpu.matmul %0, %1, %cst {dimension_numbers = #tpu.dot_dimension_numbers<[1], [0], [0], [1], [0, 0, 1, 1], [], []>} : vector<128x36xbf16>, vector<36x8xbf16>, vector<128x8xf32> -> vector<128x8xf32>
    %c0_3 = arith.constant 0 : index
    %c0_4 = arith.constant 0 : index
    %3 = vector.load %arg4[%c0_3, %c0_4] : memref<1x8xf32, #tpu.memory_space<vmem>>, vector<1x8xf32>
    %4 = vector.broadcast %3 : vector<1x8xf32> to vector<128x8xf32>
    %5 = arith.addf %2, %4 : vector<128x8xf32>
    %cst_5 = arith.constant 0.000000e+00 : f32
    %6 = vector.broadcast %cst_5 : f32 to vector<128x8xf32>
    %7 = arith.maximumf %5, %6 : vector<128x8xf32>
    %8 = arith.truncf %7 : vector<128x8xf32> to vector<128x8xbf16>
    %c0_6 = arith.constant 0 : index
    %c0_7 = arith.constant 0 : index
    %9 = vector.load %arg5[%c0_6, %c0_7] : memref<128x8xbf16, #tpu.memory_space<vmem>>, vector<128x8xbf16>
    tpu.vector_store %arg5[%c0_6, %c0_7], %8 {strides = array<i32>} : memref<128x8xbf16, #tpu.memory_space<vmem>>, vector<128x8xbf16>,
    return
  }
  func.func @transform_0(%arg0: i32, %arg1: i32) -> (i32, i32) {
    %c0_i32 = arith.constant 0 : i32
    %c0_i32_0 = arith.constant 0 : i32
    return %arg1, %c0_i32 : i32, i32
  }
  func.func @transform_1(%arg0: i32, %arg1: i32) -> (i32, i32) {
    %c0_i32 = arith.constant 0 : i32
    %c0_i32_0 = arith.constant 0 : i32
    return %c0_i32, %arg0 : i32, i32
  }
  func.func @transform_2(%arg0: i32, %arg1: i32) -> (i32, i32) {
    %c0_i32 = arith.constant 0 : i32
    %c0_i32_0 = arith.constant 0 : i32
    return %c0_i32, %arg0 : i32, i32
  }
  func.func @transform_3(%arg0: i32, %arg1: i32) -> (i32, i32) {
    %c0_i32 = arith.constant 0 : i32
    return %arg1, %arg0 : i32, i32
  }
}

module attributes {stable_mosaic.version = 11 : i64} {
  func.func @conv_bn_add1x1_relu_kernel(%arg0: i32, %arg1: i32, %arg2: memref<128x72xbf16, #tpu.memory_space<vmem>>, %arg3: memref<72x8xbf16, #tpu.memory_space<vmem>>, %arg4: memref<1x8xf32, #tpu.memory_space<vmem>>, %arg5: memref<128x4xbf16, #tpu.memory_space<vmem>>, %arg6: memref<4x8xbf16, #tpu.memory_space<vmem>>, %arg7: memref<128x8xf32, #tpu.memory_space<vmem>>) attributes {dimension_semantics = [#tpu.dimension_semantics<parallel>, #tpu.dimension_semantics<parallel>], iteration_bounds = array<i64: 1, 1>, scalar_prefetch = 0 : i64, scratch_operands = 0 : i64, tpu.core_type = #tpu.core_type<tc>, window_params = [{transform_indices = @transform_0, window_bounds = array<i64: 128, 72>}, {transform_indices = @transform_1, window_bounds = array<i64: 72, 8>}, {transform_indices = @transform_2, window_bounds = array<i64: 1, 8>}, {transform_indices = @transform_3, window_bounds = array<i64: 128, 4>}, {transform_indices = @transform_4, window_bounds = array<i64: 4, 8>}, {transform_indices = @transform_5, window_bounds = array<i64: 128, 8>}]} {
    %c0 = arith.constant 0 : index
    %c0_0 = arith.constant 0 : index
    %0 = vector.load %arg2[%c0, %c0_0] : memref<128x72xbf16, #tpu.memory_space<vmem>>, vector<128x72xbf16>
    %c0_1 = arith.constant 0 : index
    %c0_2 = arith.constant 0 : index
    %1 = vector.load %arg3[%c0_1, %c0_2] : memref<72x8xbf16, #tpu.memory_space<vmem>>, vector<72x8xbf16>
    %cst = arith.constant dense<0.000000e+00> : vector<128x8xf32>
    %2 = tpu.matmul %0, %1, %cst {dimension_numbers = #tpu.dot_dimension_numbers<[1], [0], [0], [1], [0, 0, 1, 1], [], []>} : vector<128x72xbf16>, vector<72x8xbf16>, vector<128x8xf32> -> vector<128x8xf32>
    %c0_3 = arith.constant 0 : index
    %c0_4 = arith.constant 0 : index
    %3 = vector.load %arg5[%c0_3, %c0_4] : memref<128x4xbf16, #tpu.memory_space<vmem>>, vector<128x4xbf16>
    %c0_5 = arith.constant 0 : index
    %c0_6 = arith.constant 0 : index
    %4 = vector.load %arg6[%c0_5, %c0_6] : memref<4x8xbf16, #tpu.memory_space<vmem>>, vector<4x8xbf16>
    %cst_7 = arith.constant dense<0.000000e+00> : vector<128x8xf32>
    %5 = tpu.matmul %3, %4, %cst_7 {dimension_numbers = #tpu.dot_dimension_numbers<[1], [0], [0], [1], [0, 0, 1, 1], [], []>} : vector<128x4xbf16>, vector<4x8xbf16>, vector<128x8xf32> -> vector<128x8xf32>
    %6 = arith.addf %2, %5 : vector<128x8xf32>
    %c0_8 = arith.constant 0 : index
    %c0_9 = arith.constant 0 : index
    %7 = vector.load %arg4[%c0_8, %c0_9] : memref<1x8xf32, #tpu.memory_space<vmem>>, vector<1x8xf32>
    %8 = vector.broadcast %7 : vector<1x8xf32> to vector<128x8xf32>
    %9 = arith.addf %6, %8 : vector<128x8xf32>
    %cst_10 = arith.constant 0.000000e+00 : f32
    %10 = vector.broadcast %cst_10 : f32 to vector<128x8xf32>
    %11 = arith.maximumf %9, %10 : vector<128x8xf32>
    %c0_11 = arith.constant 0 : index
    %c0_12 = arith.constant 0 : index
    %12 = vector.load %arg7[%c0_11, %c0_12] : memref<128x8xf32, #tpu.memory_space<vmem>>, vector<128x8xf32>
    tpu.vector_store %arg7[%c0_11, %c0_12], %11 {strides = array<i32>} : memref<128x8xf32, #tpu.memory_space<vmem>>, vector<128x8xf32>,
    return
  }
  func.func @transform_0(%arg0: i32, %arg1: i32) -> (i32, i32) {
    %c0_i32 = arith.constant 0 : i32
    %c0_i32_0 = arith.constant 0 : i32
    return %arg1, %c0_i32 : i32, i32
  }
  func.func @transform_1(%arg0: i32, %arg1: i32) -> (i32, i32) {
    %c0_i32 = arith.constant 0 : i32
    %c0_i32_0 = arith.constant 0 : i32
    return %c0_i32, %arg0 : i32, i32
  }
  func.func @transform_2(%arg0: i32, %arg1: i32) -> (i32, i32) {
    %c0_i32 = arith.constant 0 : i32
    %c0_i32_0 = arith.constant 0 : i32
    return %c0_i32, %arg0 : i32, i32
  }
  func.func @transform_3(%arg0: i32, %arg1: i32) -> (i32, i32) {
    %c0_i32 = arith.constant 0 : i32
    %c0_i32_0 = arith.constant 0 : i32
    return %arg1, %c0_i32 : i32, i32
  }
  func.func @transform_4(%arg0: i32, %arg1: i32) -> (i32, i32) {
    %c0_i32 = arith.constant 0 : i32
    %c0_i32_0 = arith.constant 0 : i32
    return %c0_i32, %arg0 : i32, i32
  }
  func.func @transform_5(%arg0: i32, %arg1: i32) -> (i32, i32) {
    %c0_i32 = arith.constant 0 : i32
    return %arg1, %arg0 : i32, i32
  }
}

</mosaic_0001>

<llo_original>
// kernel: residual_block_forward.2
$region0: #{residual_block_forward.2}
  #allocation0 [shape = 'u32[]', space=smem, size = 0x4, offset = 0x4, fixed_abs, tag = 'smem constant byte address 0x4 - core index']
  #allocation1 [shape = 'u32[144,128]{1,0:T(1,128)}', space=vmem, size = 0x12000, scoped, tag = 'internal scratch']
  %s0 = inlined_call_operand.vmem [shape: bf16[128,36], index: 0, kind: input, shape index: {}]
  %s1 = inlined_call_operand.vmem [shape: bf16[36,8], index: 1, kind: input, shape index: {}]
  %s2 = inlined_call_operand.vmem [shape: f32[1,8], index: 2, kind: input, shape index: {}]
  %s3 = inlined_call_operand.vmem [shape: bf16[128,8], index: 3, kind: output, shape index: {}]
  %s4 = sld [smem:[#allocation0]]
  $region22: #{residual_block_forward.2} parent=0
    _
  %s6 = ssub.s32 1, %s4
  %s7 = scalar_select 0, %s6, %s4
  // Predicated region
  $region2: #{residual_block_forward.2} parent=0 // pred_check
    _
  $region3: #{residual_block_forward.2} parent=0 // pred_check_branch
    %9 = sbr.rel (0) target = $region5
  $region4: #{residual_block_forward.2} parent=0 // pred_region
    _
  $region5: #{residual_block_forward.2} parent=0 // pred_fallthru
    _
  // Predicated region
  $region6: #{residual_block_forward.2} parent=0 // pred_check
    _
  $region7: #{residual_block_forward.2} parent=0 // pred_check_branch
    %11 = sbr.rel (0) target = $region9
  $region8: #{residual_block_forward.2} parent=0 // pred_region
    _
  $region9: #{residual_block_forward.2} parent=0 // pred_fallthru
    _
  // Predicated region
  $region10: #{residual_block_forward.2} parent=0 // pred_check
    _
  $region11: #{residual_block_forward.2} parent=0 // pred_check_branch
    %13 = sbr.rel (0) target = $region13
  $region12: #{residual_block_forward.2} parent=0 // pred_region
    _
  $region13: #{residual_block_forward.2} parent=0 // pred_fallthru
    _
  %v15 = vld [vmem:[%s0] sm:$0xf]
  %v16 = vld [vmem:[%s0 + $0x4] sm:$0xf]
  %v17 = vld [vmem:[%s0 + $0x8] sm:$0xf]
  %v18 = vld [vmem:[%s0 + $0xc] sm:$0xf]
  %v19 = vld [vmem:[%s0 + $0x10] sm:$0xf]
  %v20 = vld [vmem:[%s0 + $0x14] sm:$0xf]
  %v21 = vld [vmem:[%s0 + $0x18] sm:$0xf]
  %v22 = vld [vmem:[%s0 + $0x1c] sm:$0xf]
  %v23 = vld [vmem:[%s0 + $0x20] sm:$0xf]
  %v24 = vld [vmem:[%s0 + $0x24] sm:$0xf]
  %v25 = vld [vmem:[%s0 + $0x28] sm:$0xf]
  %v26 = vld [vmem:[%s0 + $0x2c] sm:$0xf]
  %v27 = vld [vmem:[%s0 + $0x30] sm:$0xf]
  %v28 = vld [vmem:[%s0 + $0x34] sm:$0xf]
  %v29 = vld [vmem:[%s0 + $0x38] sm:$0xf]
  %v30 = vld [vmem:[%s0 + $0x3c] sm:$0xf]
  %v31 = vld [vmem:[%s1] sm:$0xf]
  %v32 = vld [vmem:[%s1 + $0x4] sm:$0xf]
  %v33 = vld [vmem:[%s1 + $0x8] sm:$0xf]
  %v34 = vld [vmem:[%s1 + $0xc] sm:$0xf]
  %v35 = vld [vmem:[%s1 + $0x10] sm:$0x3]
  %v36 = vld [vmem:[%s2] sm:$0x1]
  %v38 = vlaneseq
  %v39 = vshrl.u32 %v38, 7
  %v40 = vsub.s32 0, %v39
  %v41 = vrot.slane %v36, %v40
  %v59 = vunpack.c.l.b16 %v15
  %v60 = vunpack.c.l.b16 %v16
  %v61 = vunpack.c.l.b16 %v17
  %v62 = vunpack.c.l.b16 %v18
  %v63 = vunpack.c.l.b16 %v19
  %v64 = vunpack.c.l.b16 %v20
  %v65 = vunpack.c.l.b16 %v21
  %v66 = vunpack.c.l.b16 %v22
  %v67 = vunpack.c.l.b16 %v23
  %v68 = vunpack.c.l.b16 %v24
  %v69 = vunpack.c.l.b16 %v25
  %v70 = vunpack.c.l.b16 %v26
  %v71 = vunpack.c.l.b16 %v27
  %v72 = vunpack.c.l.b16 %v28
  %v73 = vunpack.c.l.b16 %v29
  %v74 = vunpack.c.l.b16 %v30
  %v75 = vpack.c.b16 %v60, %v59
  %v76 = vpack.c.b16 %v62, %v61
  %v77 = vpack.c.b16 %v64, %v63
  %v78 = vpack.c.b16 %v66, %v65
  %v79 = vpack.c.b16 %v68, %v67
  %v80 = vpack.c.b16 %v70, %v69
  %v81 = vpack.c.b16 %v72, %v71
  %v82 = vpack.c.b16 %v74, %v73
  %v88 = vunpack.c.l.b16 %v31
  %v89 = vunpack.c.l.b16 %v32
  %v90 = vunpack.c.l.b16 %v33
  %v91 = vunpack.c.l.b16 %v34
  %v92 = vunpack.c.l.b16 %v35
  %v93 = vpack.c.b16 %v89, %v88
  %v94 = vpack.c.b16 %v91, %v90
  %v95 = vpack.c.b16 %v92, %v92
  %vm98 = vcmask 293888
  %v100 = vsel %vm98, %v75, 0
  %v103 = vsel %vm98, %v76, 0
  %v106 = vsel %vm98, %v77, 0
  %v109 = vsel %vm98, %v78, 0
  %v112 = vsel %vm98, %v79, 0
  %v115 = vsel %vm98, %v80, 0
  %v118 = vsel %vm98, %v81, 0
  %v121 = vsel %vm98, %v82, 0
  %vm123 = vcmask 1041408
  %v125 = vsel %vm123, %v95, 0
  %127 = vmatprep.subr.bf16.mxu0 0
  %128 = vmatpush1.bf16.msra.mxu0 0
  %129 = vmatprep.subr.bf16.mxu0 0
  %130 = vmatpush1.bf16.msra.mxu0 0
  %131 = vmatprep.subr.bf16.mxu0 0
  %132 = vmatpush1.bf16.msra.mxu0 0
  %133 = vmatprep.subr.bf16.mxu0 0
  %134 = vmatpush1.bf16.msra.mxu0 0
  %135 = vmatprep.subr.bf16.mxu0 0
  %136 = vmatpush1.bf16.msra.mxu0 0
  %137 = vmatprep.subr.bf16.mxu0 0
  %138 = vmatpush1.bf16.msra.mxu0 %v125
  %139 = vmatprep.subr.bf16.mxu0 0
  %140 = vmatpush1.bf16.msra.mxu0 %v94
  %141 = vmatprep.subr.bf16.mxu0 0
  %142 = vmatpush1.bf16.msra.mxu0 %v93
  %143 = vmatprep.subr.bf16.mxu0 0
  %144 = vmatpush2.bf16.msra.mxu0 0
  %145 = vmatprep.subr.bf16.mxu0 0
  %146 = vmatpush2.bf16.msra.mxu0 0
  %147 = vmatprep.subr.bf16.mxu0 0
  %148 = vmatpush2.bf16.msra.mxu0 0
  %149 = vmatprep.subr.bf16.mxu0 0
  %150 = vmatpush2.bf16.msra.mxu0 0
  %151 = vmatprep.subr.bf16.mxu0 0
  %152 = vmatpush2.bf16.msra.mxu0 0
  %153 = vmatprep.subr.bf16.mxu0 0
  %154 = vmatpush2.bf16.msra.mxu0 0
  %155 = vmatprep.subr.bf16.mxu0 0
  %156 = vmatpush2.bf16.msra.mxu0 0
  %157 = vmatprep.subr.bf16.mxu0 0
  %158 = vmatpush2.bf16.msra.mxu0 0
  %159 = vmatprep.mubr.bf16.mxu0 0
  %160 = vmatmul.mubr.bf16.gmra.mxu0 %v100
  %v161 = vpop.f32.mrf.mxu0
  %v162 = vadd.f32 %v41, %v161
  %v163 = vpop.f32.mrf.mxu0
  %v164 = vpop.f32.mrf.mxu0
  %v165 = vadd.f32 %v41, %v164
  %v166 = vpop.f32.mrf.mxu0
  %167 = vmatprep.mubr.bf16.mxu0 0
  %168 = vmatmul.mubr.bf16.gmra.mxu0 %v103
  %v169 = vpop.f32.mrf.mxu0
  %v170 = vadd.f32 %v41, %v169
  %v171 = vpop.f32.mrf.mxu0
  %v172 = vpop.f32.mrf.mxu0
  %v173 = vadd.f32 %v41, %v172
  %v174 = vpop.f32.mrf.mxu0
  %175 = vmatprep.mubr.bf16.mxu0 0
  %176 = vmatmul.mubr.bf16.gmra.mxu0 %v106
  %v177 = vpop.f32.mrf.mxu0
  %v178 = vadd.f32 %v41, %v177
  %v179 = vpop.f32.mrf.mxu0
  %v180 = vpop.f32.mrf.mxu0
  %v181 = vadd.f32 %v41, %v180
  %v182 = vpop.f32.mrf.mxu0
  %183 = vmatprep.mubr.bf16.mxu0 0
  %184 = vmatmul.mubr.bf16.gmra.mxu0 %v109
  %v185 = vpop.f32.mrf.mxu0
  %v186 = vadd.f32 %v41, %v185
  %v187 = vpop.f32.mrf.mxu0
  %v188 = vpop.f32.mrf.mxu0
  %v189 = vadd.f32 %v41, %v188
  %v190 = vpop.f32.mrf.mxu0
  %191 = vmatprep.mubr.bf16.mxu0 0
  %192 = vmatmul.mubr.bf16.gmra.mxu0 %v112
  %v193 = vpop.f32.mrf.mxu0
  %v194 = vadd.f32 %v41, %v193
  %v195 = vpop.f32.mrf.mxu0
  %v196 = vpop.f32.mrf.mxu0
  %v197 = vadd.f32 %v41, %v196
  %v198 = vpop.f32.mrf.mxu0
  %199 = vmatprep.mubr.bf16.mxu0 0
  %200 = vmatmul.mubr.bf16.gmra.mxu0 %v115
  %v201 = vpop.f32.mrf.mxu0
  %v202 = vadd.f32 %v41, %v201
  %v203 = vpop.f32.mrf.mxu0
  %v204 = vpop.f32.mrf.mxu0
  %v205 = vadd.f32 %v41, %v204
  %v206 = vpop.f32.mrf.mxu0
  %207 = vmatprep.mubr.bf16.mxu0 0
  %208 = vmatmul.mubr.bf16.gmra.mxu0 %v118
  %v209 = vpop.f32.mrf.mxu0
  %v210 = vadd.f32 %v41, %v209
  %v211 = vpop.f32.mrf.mxu0
  %v212 = vpop.f32.mrf.mxu0
  %v213 = vadd.f32 %v41, %v212
  %v214 = vpop.f32.mrf.mxu0
  %215 = vmatprep.mubr.bf16.mxu0 0
  %216 = vmatmul.mubr.bf16.gmra.mxu0 %v121
  %v217 = vpop.f32.mrf.mxu0
  %v218 = vadd.f32 %v41, %v217
  %v219 = vpop.f32.mrf.mxu0
  %v220 = vpop.f32.mrf.mxu0
  %v221 = vadd.f32 %v41, %v220
  %v222 = vpop.f32.mrf.mxu0
  %223 = vdwg.mxu0
  %v224 = vmax.f32 %v162, 0.0
  %v225 = vmax.f32 %v165, 0.0
  %v226 = vmax.f32 %v170, 0.0
  %v227 = vmax.f32 %v173, 0.0
  %v228 = vmax.f32 %v178, 0.0
  %v229 = vmax.f32 %v181, 0.0
  %v230 = vmax.f32 %v186, 0.0
  %v231 = vmax.f32 %v189, 0.0
  %v232 = vmax.f32 %v194, 0.0
  %v233 = vmax.f32 %v197, 0.0
  %v234 = vmax.f32 %v202, 0.0
  %v235 = vmax.f32 %v205, 0.0
  %v236 = vmax.f32 %v210, 0.0
  %v237 = vmax.f32 %v213, 0.0
  %v238 = vmax.f32 %v218, 0.0
  %v239 = vmax.f32 %v221, 0.0
  %v240 = vpack.c.bf16 %v225, %v224
  %v241 = vpack.c.bf16 %v227, %v226
  %v242 = vpack.c.bf16 %v229, %v228
  %v243 = vpack.c.bf16 %v231, %v230
  %v244 = vpack.c.bf16 %v233, %v232
  %v245 = vpack.c.bf16 %v235, %v234
  %v246 = vpack.c.bf16 %v237, %v236
  %v247 = vpack.c.bf16 %v239, %v238
  %v256 = vunpack.c.l.b16 %v240
  %v257 = vunpack.c.h.b16 %v240
  %v258 = vunpack.c.l.b16 %v241
  %v259 = vunpack.c.h.b16 %v241
  %v260 = vunpack.c.l.b16 %v242
  %v261 = vunpack.c.h.b16 %v242
  %v262 = vunpack.c.l.b16 %v243
  %v263 = vunpack.c.h.b16 %v243
  %v264 = vunpack.c.l.b16 %v244
  %v265 = vunpack.c.h.b16 %v244
  %v266 = vunpack.c.l.b16 %v245
  %v267 = vunpack.c.h.b16 %v245
  %v268 = vunpack.c.l.b16 %v246
  %v269 = vunpack.c.h.b16 %v246
  %v270 = vunpack.c.l.b16 %v247
  %v271 = vunpack.c.h.b16 %v247
  %v272 = vpack.c.b16 %v256, %v256
  %v273 = vpack.c.b16 %v257, %v257
  %v274 = vpack.c.b16 %v258, %v258
  %v275 = vpack.c.b16 %v259, %v259
  %v276 = vpack.c.b16 %v260, %v260
  %v277 = vpack.c.b16 %v261, %v261
  %v278 = vpack.c.b16 %v262, %v262
  %v279 = vpack.c.b16 %v263, %v263
  %v280 = vpack.c.b16 %v264, %v264
  %v281 = vpack.c.b16 %v265, %v265
  %v282 = vpack.c.b16 %v266, %v266
  %v283 = vpack.c.b16 %v267, %v267
  %v284 = vpack.c.b16 %v268, %v268
  %v285 = vpack.c.b16 %v269, %v269
  %v286 = vpack.c.b16 %v270, %v270
  %v287 = vpack.c.b16 %v271, %v271
  %vm304 = vcmask 60416
  %305 = vst.msk [vmem:[%s3] sm:$0xf] %vm304, %v272
  %306 = vst.msk [vmem:[%s3 + $0x4] sm:$0xf] %vm304, %v273
  %307 = vst.msk [vmem:[%s3 + $0x8] sm:$0xf] %vm304, %v274
  %308 = vst.msk [vmem:[%s3 + $0xc] sm:$0xf] %vm304, %v275
  %309 = vst.msk [vmem:[%s3 + $0x10] sm:$0xf] %vm304, %v276
  %310 = vst.msk [vmem:[%s3 + $0x14] sm:$0xf] %vm304, %v277
  %311 = vst.msk [vmem:[%s3 + $0x18] sm:$0xf] %vm304, %v278
  %312 = vst.msk [vmem:[%s3 + $0x1c] sm:$0xf] %vm304, %v279
  %313 = vst.msk [vmem:[%s3 + $0x20] sm:$0xf] %vm304, %v280
  %314 = vst.msk [vmem:[%s3 + $0x24] sm:$0xf] %vm304, %v281
  %315 = vst.msk [vmem:[%s3 + $0x28] sm:$0xf] %vm304, %v282
  %316 = vst.msk [vmem:[%s3 + $0x2c] sm:$0xf] %vm304, %v283
  %317 = vst.msk [vmem:[%s3 + $0x30] sm:$0xf] %vm304, %v284
  %318 = vst.msk [vmem:[%s3 + $0x34] sm:$0xf] %vm304, %v285
  %319 = vst.msk [vmem:[%s3 + $0x38] sm:$0xf] %vm304, %v286
  %320 = vst.msk [vmem:[%s3 + $0x3c] sm:$0xf] %vm304, %v287
  // Predicated region
  $region14: #{residual_block_forward.2} parent=0 // pred_check
    _
  $region15: #{residual_block_forward.2} parent=0 // pred_check_branch
    %322 = sbr.rel (0) target = $region17
  $region16: #{residual_block_forward.2} parent=0 // pred_region
    _
  $region17: #{residual_block_forward.2} parent=0 // pred_fallthru
    _
  // Predicated region
  $region18: #{residual_block_forward.2} parent=0 // pred_check
    _
  $region19: #{residual_block_forward.2} parent=0 // pred_check_branch
    %324 = sbr.rel (0) target = $region21
  $region20: #{residual_block_forward.2} parent=0 // pred_region
    _
  $region21: #{residual_block_forward.2} parent=0 // pred_fallthru
    _

// kernel: residual_block_forward.3
$region0: #{residual_block_forward.3}
  #allocation0 [shape = 'u32[]', space=smem, size = 0x4, offset = 0x4, fixed_abs, tag = 'smem constant byte address 0x4 - core index']
  #allocation1 [shape = 'u32[144,128]{1,0:T(1,128)}', space=vmem, size = 0x12000, scoped, tag = 'internal scratch']
  %s0 = inlined_call_operand.vmem [shape: bf16[128,72], index: 0, kind: input, shape index: {}]
  %s1 = inlined_call_operand.vmem [shape: bf16[72,8], index: 1, kind: input, shape index: {}]
  %s2 = inlined_call_operand.vmem [shape: f32[1,8], index: 2, kind: input, shape index: {}]
  %s3 = inlined_call_operand.vmem [shape: bf16[128,4], index: 3, kind: input, shape index: {}]
  %s4 = inlined_call_operand.vmem [shape: bf16[4,8], index: 4, kind: input, shape index: {}]
  %s5 = inlined_call_operand.vmem [shape: f32[128,8], index: 5, kind: output, shape index: {}]
  %s6 = sld [smem:[#allocation0]]
  $region30: #{residual_block_forward.3} parent=0
    _
  %s8 = ssub.s32 1, %s6
  %s9 = scalar_select 0, %s8, %s6
  // Predicated region
  $region2: #{residual_block_forward.3} parent=0 // pred_check
    _
  $region3: #{residual_block_forward.3} parent=0 // pred_check_branch
    %11 = sbr.rel (0) target = $region5
  $region4: #{residual_block_forward.3} parent=0 // pred_region
    _
  $region5: #{residual_block_forward.3} parent=0 // pred_fallthru
    _
  // Predicated region
  $region6: #{residual_block_forward.3} parent=0 // pred_check
    _
  $region7: #{residual_block_forward.3} parent=0 // pred_check_branch
    %13 = sbr.rel (0) target = $region9
  $region8: #{residual_block_forward.3} parent=0 // pred_region
    _
  $region9: #{residual_block_forward.3} parent=0 // pred_fallthru
    _
  // Predicated region
  $region10: #{residual_block_forward.3} parent=0 // pred_check
    _
  $region11: #{residual_block_forward.3} parent=0 // pred_check_branch
    %15 = sbr.rel (0) target = $region13
  $region12: #{residual_block_forward.3} parent=0 // pred_region
    _
  $region13: #{residual_block_forward.3} parent=0 // pred_fallthru
    _
  // Predicated region
  $region14: #{residual_block_forward.3} parent=0 // pred_check
    _
  $region15: #{residual_block_forward.3} parent=0 // pred_check_branch
    %17 = sbr.rel (0) target = $region17
  $region16: #{residual_block_forward.3} parent=0 // pred_region
    _
  $region17: #{residual_block_forward.3} parent=0 // pred_fallthru
    _
  // Predicated region
  $region18: #{residual_block_forward.3} parent=0 // pred_check
    _
  $region19: #{residual_block_forward.3} parent=0 // pred_check_branch
    %19 = sbr.rel (0) target = $region21
  $region20: #{residual_block_forward.3} parent=0 // pred_region
    _
  $region21: #{residual_block_forward.3} parent=0 // pred_fallthru
    _
  %v21 = vld [vmem:[%s0] sm:$0xf]
  %v22 = vld [vmem:[%s0 + $0x4] sm:$0xf]
  %v23 = vld [vmem:[%s0 + $0x8] sm:$0xf]
  %v24 = vld [vmem:[%s0 + $0xc] sm:$0xf]
  %v25 = vld [vmem:[%s0 + $0x10] sm:$0xf]
  %v26 = vld [vmem:[%s0 + $0x14] sm:$0xf]
  %v27 = vld [vmem:[%s0 + $0x18] sm:$0xf]
  %v28 = vld [vmem:[%s0 + $0x1c] sm:$0xf]
  %v29 = vld [vmem:[%s0 + $0x20] sm:$0xf]
  %v30 = vld [vmem:[%s0 + $0x24] sm:$0xf]
  %v31 = vld [vmem:[%s0 + $0x28] sm:$0xf]
  %v32 = vld [vmem:[%s0 + $0x2c] sm:$0xf]
  %v33 = vld [vmem:[%s0 + $0x30] sm:$0xf]
  %v34 = vld [vmem:[%s0 + $0x34] sm:$0xf]
  %v35 = vld [vmem:[%s0 + $0x38] sm:$0xf]
  %v36 = vld [vmem:[%s0 + $0x3c] sm:$0xf]
  %v37 = vld [vmem:[%s1] sm:$0xf]
  %v38 = vld [vmem:[%s1 + $0x4] sm:$0xf]
  %v39 = vld [vmem:[%s1 + $0x8] sm:$0xf]
  %v40 = vld [vmem:[%s1 + $0xc] sm:$0xf]
  %v41 = vld [vmem:[%s1 + $0x10] sm:$0xf]
  %v42 = vld [vmem:[%s1 + $0x14] sm:$0xf]
  %v43 = vld [vmem:[%s1 + $0x18] sm:$0xf]
  %v44 = vld [vmem:[%s1 + $0x1c] sm:$0xf]
  %v45 = vld [vmem:[%s1 + $0x20] sm:$0xf]
  %v46 = vld [vmem:[%s3] sm:$0xf]
  %v47 = vld [vmem:[%s3 + $0x4] sm:$0xf]
  %v48 = vld [vmem:[%s3 + $0x8] sm:$0xf]
  %v49 = vld [vmem:[%s3 + $0xc] sm:$0xf]
  %v50 = vld [vmem:[%s3 + $0x10] sm:$0xf]
  %v51 = vld [vmem:[%s3 + $0x14] sm:$0xf]
  %v52 = vld [vmem:[%s3 + $0x18] sm:$0xf]
  %v53 = vld [vmem:[%s3 + $0x1c] sm:$0xf]
  %v54 = vld [vmem:[%s3 + $0x20] sm:$0xf]
  %v55 = vld [vmem:[%s3 + $0x24] sm:$0xf]
  %v56 = vld [vmem:[%s3 + $0x28] sm:$0xf]
  %v57 = vld [vmem:[%s3 + $0x2c] sm:$0xf]
  %v58 = vld [vmem:[%s3 + $0x30] sm:$0xf]
  %v59 = vld [vmem:[%s3 + $0x34] sm:$0xf]
  %v60 = vld [vmem:[%s3 + $0x38] sm:$0xf]
  %v61 = vld [vmem:[%s3 + $0x3c] sm:$0xf]
  %v62 = vld [vmem:[%s4] sm:$0x3]
  %v79 = vunpack.c.l.b16 %v46
  %v80 = vunpack.c.l.b16 %v47
  %v81 = vunpack.c.l.b16 %v48
  %v82 = vunpack.c.l.b16 %v49
  %v83 = vunpack.c.l.b16 %v50
  %v84 = vunpack.c.l.b16 %v51
  %v85 = vunpack.c.l.b16 %v52
  %v86 = vunpack.c.l.b16 %v53
  %v87 = vunpack.c.l.b16 %v54
  %v88 = vunpack.c.l.b16 %v55
  %v89 = vunpack.c.l.b16 %v56
  %v90 = vunpack.c.l.b16 %v57
  %v91 = vunpack.c.l.b16 %v58
  %v92 = vunpack.c.l.b16 %v59
  %v93 = vunpack.c.l.b16 %v60
  %v94 = vunpack.c.l.b16 %v61
  %v95 = vpack.c.b16 %v80, %v79
  %v96 = vpack.c.b16 %v82, %v81
  %v97 = vpack.c.b16 %v84, %v83
  %v98 = vpack.c.b16 %v86, %v85
  %v99 = vpack.c.b16 %v88, %v87
  %v100 = vpack.c.b16 %v90, %v89
  %v101 = vpack.c.b16 %v92, %v91
  %v102 = vpack.c.b16 %v94, %v93
  %vm103 = vcmask 31744
  %v105 = vsel %vm103, %v95, 0
  %v108 = vsel %vm103, %v96, 0
  %v111 = vsel %vm103, %v97, 0
  %v114 = vsel %vm103, %v98, 0
  %v117 = vsel %vm103, %v99, 0
  %v120 = vsel %vm103, %v100, 0
  %v123 = vsel %vm103, %v101, 0
  %v126 = vsel %vm103, %v102, 0
  %vm128 = vcmask 1041408
  %v130 = vsel %vm128, %v62, 0
  %132 = vmatprep.subr.bf16.mxu0 0
  %133 = vmatpush1.bf16.msra.mxu0 0
  %134 = vmatprep.subr.bf16.mxu0 0
  %135 = vmatpush1.bf16.msra.mxu0 0
  %136 = vmatprep.subr.bf16.mxu0 0
  %137 = vmatpush1.bf16.msra.mxu0 0
  %138 = vmatprep.subr.bf16.mxu0 0
  %139 = vmatpush1.bf16.msra.mxu0 0
  %140 = vmatprep.subr.bf16.mxu0 0
  %141 = vmatpush1.bf16.msra.mxu0 0
  %142 = vmatprep.subr.bf16.mxu0 0
  %143 = vmatpush1.bf16.msra.mxu0 0
  %144 = vmatprep.subr.bf16.mxu0 0
  %145 = vmatpush1.bf16.msra.mxu0 0
  %146 = vmatprep.subr.bf16.mxu0 0
  %147 = vmatpush1.bf16.msra.mxu0 %v130
  %148 = vmatprep.subr.bf16.mxu0 0
  %149 = vmatpush2.bf16.msra.mxu0 0
  %150 = vmatprep.subr.bf16.mxu0 0
  %151 = vmatpush2.bf16.msra.mxu0 0
  %152 = vmatprep.subr.bf16.mxu0 0
  %153 = vmatpush2.bf16.msra.mxu0 0
  %154 = vmatprep.subr.bf16.mxu0 0
  %155 = vmatpush2.bf16.msra.mxu0 0
  %156 = vmatprep.subr.bf16.mxu0 0
  %157 = vmatpush2.bf16.msra.mxu0 0
  %158 = vmatprep.subr.bf16.mxu0 0
  %159 = vmatpush2.bf16.msra.mxu0 0
  %160 = vmatprep.subr.bf16.mxu0 0
  %161 = vmatpush2.bf16.msra.mxu0 0
  %162 = vmatprep.subr.bf16.mxu0 0
  %163 = vmatpush2.bf16.msra.mxu0 0
  %164 = vmatprep.mubr.bf16.mxu0 0
  %165 = vmatmul.mubr.bf16.gmra.mxu0 %v105
  %v166 = vpop.f32.mrf.mxu0
  %v167 = vadd.f32 0.0, %v166
  %v168 = vpop.f32.mrf.mxu0
  %v169 = vpop.f32.mrf.mxu0
  %v170 = vadd.f32 0.0, %v169
  %v171 = vpop.f32.mrf.mxu0
  %172 = vmatprep.mubr.bf16.mxu0 0
  %173 = vmatmul.mubr.bf16.gmra.mxu0 %v108
  %v174 = vpop.f32.mrf.mxu0
  %v175 = vadd.f32 0.0, %v174
  %v176 = vpop.f32.mrf.mxu0
  %v177 = vpop.f32.mrf.mxu0
  %v178 = vadd.f32 0.0, %v177
  %v179 = vpop.f32.mrf.mxu0
  %180 = vmatprep.mubr.bf16.mxu0 0
  %181 = vmatmul.mubr.bf16.gmra.mxu0 %v111
  %v182 = vpop.f32.mrf.mxu0
  %v183 = vadd.f32 0.0, %v182
  %v184 = vpop.f32.mrf.mxu0
  %v185 = vpop.f32.mrf.mxu0
  %v186 = vadd.f32 0.0, %v185
  %v187 = vpop.f32.mrf.mxu0
  %188 = vmatprep.mubr.bf16.mxu0 0
  %189 = vmatmul.mubr.bf16.gmra.mxu0 %v114
  %v190 = vpop.f32.mrf.mxu0
  %v191 = vadd.f32 0.0, %v190
  %v192 = vpop.f32.mrf.mxu0
  %v193 = vpop.f32.mrf.mxu0
  %v194 = vadd.f32 0.0, %v193
  %v195 = vpop.f32.mrf.mxu0
  %196 = vmatprep.mubr.bf16.mxu0 0
  %197 = vmatmul.mubr.bf16.gmra.mxu0 %v117
  %v198 = vpop.f32.mrf.mxu0
  %v199 = vadd.f32 0.0, %v198
  %v200 = vpop.f32.mrf.mxu0
  %v201 = vpop.f32.mrf.mxu0
  %v202 = vadd.f32 0.0, %v201
  %v203 = vpop.f32.mrf.mxu0
  %204 = vmatprep.mubr.bf16.mxu0 0
  %205 = vmatmul.mubr.bf16.gmra.mxu0 %v120
  %v206 = vpop.f32.mrf.mxu0
  %v207 = vadd.f32 0.0, %v206
  %v208 = vpop.f32.mrf.mxu0
  %v209 = vpop.f32.mrf.mxu0
  %v210 = vadd.f32 0.0, %v209
  %v211 = vpop.f32.mrf.mxu0
  %212 = vmatprep.mubr.bf16.mxu0 0
  %213 = vmatmul.mubr.bf16.gmra.mxu0 %v123
  %v214 = vpop.f32.mrf.mxu0
  %v215 = vadd.f32 0.0, %v214
  %v216 = vpop.f32.mrf.mxu0
  %v217 = vpop.f32.mrf.mxu0
  %v218 = vadd.f32 0.0, %v217
  %v219 = vpop.f32.mrf.mxu0
  %220 = vmatprep.mubr.bf16.mxu0 0
  %221 = vmatmul.mubr.bf16.gmra.mxu0 %v126
  %v222 = vpop.f32.mrf.mxu0
  %v223 = vadd.f32 0.0, %v222
  %v224 = vpop.f32.mrf.mxu0
  %v225 = vpop.f32.mrf.mxu0
  %v226 = vadd.f32 0.0, %v225
  %v227 = vpop.f32.mrf.mxu0
  %228 = vdwg.mxu0
  %v245 = vunpack.c.l.b16 %v21
  %v246 = vunpack.c.l.b16 %v22
  %v247 = vunpack.c.l.b16 %v23
  %v248 = vunpack.c.l.b16 %v24
  %v249 = vunpack.c.l.b16 %v25
  %v250 = vunpack.c.l.b16 %v26
  %v251 = vunpack.c.l.b16 %v27
  %v252 = vunpack.c.l.b16 %v28
  %v253 = vunpack.c.l.b16 %v29
  %v254 = vunpack.c.l.b16 %v30
  %v255 = vunpack.c.l.b16 %v31
  %v256 = vunpack.c.l.b16 %v32
  %v257 = vunpack.c.l.b16 %v33
  %v258 = vunpack.c.l.b16 %v34
  %v259 = vunpack.c.l.b16 %v35
  %v260 = vunpack.c.l.b16 %v36
  %v261 = vpack.c.b16 %v246, %v245
  %v262 = vpack.c.b16 %v248, %v247
  %v263 = vpack.c.b16 %v250, %v249
  %v264 = vpack.c.b16 %v252, %v251
  %v265 = vpack.c.b16 %v254, %v253
  %v266 = vpack.c.b16 %v256, %v255
  %v267 = vpack.c.b16 %v258, %v257
  %v268 = vpack.c.b16 %v260, %v259
  %v278 = vunpack.c.l.b16 %v37
  %v279 = vunpack.c.l.b16 %v38
  %v280 = vunpack.c.l.b16 %v39
  %v281 = vunpack.c.l.b16 %v40
  %v282 = vunpack.c.l.b16 %v41
  %v283 = vunpack.c.l.b16 %v42
  %v284 = vunpack.c.l.b16 %v43
  %v285 = vunpack.c.l.b16 %v44
  %v286 = vunpack.c.l.b16 %v45
  %v287 = vpack.c.b16 %v279, %v278
  %v288 = vpack.c.b16 %v281, %v280
  %v289 = vpack.c.b16 %v283, %v282
  %v290 = vpack.c.b16 %v285, %v284
  %v291 = vpack.c.b16 %v286, %v286
  %vm296 = vcmask 588800
  %v298 = vsel %vm296, %v261, 0
  %v301 = vsel %vm296, %v262, 0
  %v304 = vsel %vm296, %v263, 0
  %v307 = vsel %vm296, %v264, 0
  %v310 = vsel %vm296, %v265, 0
  %v313 = vsel %vm296, %v266, 0
  %v316 = vsel %vm296, %v267, 0
  %v319 = vsel %vm296, %v268, 0
  %vm321 = vcmask 1043456
  %v323 = vsel %vm321, %v291, 0
  %325 = vmatprep.subr.bf16.mxu0 0
  %326 = vmatpush1.bf16.msra.mxu0 0
  %327 = vmatprep.subr.bf16.mxu0 0
  %328 = vmatpush1.bf16.msra.mxu0 0
  %329 = vmatprep.subr.bf16.mxu0 0
  %330 = vmatpush1.bf16.msra.mxu0 0
  %331 = vmatprep.subr.bf16.mxu0 0
  %332 = vmatpush1.bf16.msra.mxu0 %v323
  %333 = vmatprep.subr.bf16.mxu0 0
  %334 = vmatpush1.bf16.msra.mxu0 %v290
  %335 = vmatprep.subr.bf16.mxu0 0
  %336 = vmatpush1.bf16.msra.mxu0 %v289
  %337 = vmatprep.subr.bf16.mxu0 0
  %338 = vmatpush1.bf16.msra.mxu0 %v288
  %339 = vmatprep.subr.bf16.mxu0 0
  %340 = vmatpush1.bf16.msra.mxu0 %v287
  %341 = vmatprep.subr.bf16.mxu0 0
  %342 = vmatpush2.bf16.msra.mxu0 0
  %343 = vmatprep.subr.bf16.mxu0 0
  %344 = vmatpush2.bf16.msra.mxu0 0
  %345 = vmatprep.subr.bf16.mxu0 0
  %346 = vmatpush2.bf16.msra.mxu0 0
  %347 = vmatprep.subr.bf16.mxu0 0
  %348 = vmatpush2.bf16.msra.mxu0 0
  %349 = vmatprep.subr.bf16.mxu0 0
  %350 = vmatpush2.bf16.msra.mxu0 0
  %351 = vmatprep.subr.bf16.mxu0 0
  %352 = vmatpush2.bf16.msra.mxu0 0
  %353 = vmatprep.subr.bf16.mxu0 0
  %354 = vmatpush2.bf16.msra.mxu0 0
  %355 = vmatprep.subr.bf16.mxu0 0
  %356 = vmatpush2.bf16.msra.mxu0 0
  %357 = vmatprep.mubr.bf16.mxu0 0
  %358 = vmatmul.mubr.bf16.gmra.mxu0 %v298
  %v359 = vpop.f32.mrf.mxu0
  %v360 = vadd.f32 %v167, %v359
  %v361 = vpop.f32.mrf.mxu0
  %v362 = vpop.f32.mrf.mxu0
  %v363 = vadd.f32 %v170, %v362
  %v364 = vpop.f32.mrf.mxu0
  %365 = vmatprep.mubr.bf16.mxu0 0
  %366 = vmatmul.mubr.bf16.gmra.mxu0 %v301
  %v367 = vpop.f32.mrf.mxu0
  %v368 = vadd.f32 %v175, %v367
  %v369 = vpop.f32.mrf.mxu0
  %v370 = vpop.f32.mrf.mxu0
  %v371 = vadd.f32 %v178, %v370
  %v372 = vpop.f32.mrf.mxu0
  %373 = vmatprep.mubr.bf16.mxu0 0
  %374 = vmatmul.mubr.bf16.gmra.mxu0 %v304
  %v375 = vpop.f32.mrf.mxu0
  %v376 = vadd.f32 %v183, %v375
  %v377 = vpop.f32.mrf.mxu0
  %v378 = vpop.f32.mrf.mxu0
  %v379 = vadd.f32 %v186, %v378
  %v380 = vpop.f32.mrf.mxu0
  %381 = vmatprep.mubr.bf16.mxu0 0
  %382 = vmatmul.mubr.bf16.gmra.mxu0 %v307
  %v383 = vpop.f32.mrf.mxu0
  %v384 = vadd.f32 %v191, %v383
  %v385 = vpop.f32.mrf.mxu0
  %v386 = vpop.f32.mrf.mxu0
  %v387 = vadd.f32 %v194, %v386
  %v388 = vpop.f32.mrf.mxu0
  %389 = vmatprep.mubr.bf16.mxu0 0
  %390 = vmatmul.mubr.bf16.gmra.mxu0 %v310
  %v391 = vpop.f32.mrf.mxu0
  %v392 = vadd.f32 %v199, %v391
  %v393 = vpop.f32.mrf.mxu0
  %v394 = vpop.f32.mrf.mxu0
  %v395 = vadd.f32 %v202, %v394
  %v396 = vpop.f32.mrf.mxu0
  %397 = vmatprep.mubr.bf16.mxu0 0
  %398 = vmatmul.mubr.bf16.gmra.mxu0 %v313
  %v399 = vpop.f32.mrf.mxu0
  %v400 = vadd.f32 %v207, %v399
  %v401 = vpop.f32.mrf.mxu0
  %v402 = vpop.f32.mrf.mxu0
  %v403 = vadd.f32 %v210, %v402
  %v404 = vpop.f32.mrf.mxu0
  %405 = vmatprep.mubr.bf16.mxu0 0
  %406 = vmatmul.mubr.bf16.gmra.mxu0 %v316
  %v407 = vpop.f32.mrf.mxu0
  %v408 = vadd.f32 %v215, %v407
  %v409 = vpop.f32.mrf.mxu0
  %v410 = vpop.f32.mrf.mxu0
  %v411 = vadd.f32 %v218, %v410
  %v412 = vpop.f32.mrf.mxu0
  %413 = vmatprep.mubr.bf16.mxu0 0
  %414 = vmatmul.mubr.bf16.gmra.mxu0 %v319
  %v415 = vpop.f32.mrf.mxu0
  %v416 = vadd.f32 %v223, %v415
  %v417 = vpop.f32.mrf.mxu0
  %v418 = vpop.f32.mrf.mxu0
  %v419 = vadd.f32 %v226, %v418
  %v420 = vpop.f32.mrf.mxu0
  %421 = vdwg.mxu0
  %v422 = vld [vmem:[%s2] sm:$0x1]
  %v424 = vlaneseq
  %v425 = vshrl.u32 %v424, 7
  %v426 = vsub.s32 0, %v425
  %v427 = vrot.slane %v422, %v426
  %v429 = vadd.f32 %v360, %v427
  %v430 = vadd.f32 %v363, %v427
  %v431 = vadd.f32 %v368, %v427
  %v432 = vadd.f32 %v371, %v427
  %v433 = vadd.f32 %v376, %v427
  %v434 = vadd.f32 %v379, %v427
  %v435 = vadd.f32 %v384, %v427
  %v436 = vadd.f32 %v387, %v427
  %v437 = vadd.f32 %v392, %v427
  %v438 = vadd.f32 %v395, %v427
  %v439 = vadd.f32 %v400, %v427
  %v440 = vadd.f32 %v403, %v427
  %v441 = vadd.f32 %v408, %v427
  %v442 = vadd.f32 %v411, %v427
  %v443 = vadd.f32 %v416, %v427
  %v444 = vadd.f32 %v419, %v427
  %v445 = vmax.f32 %v429, 0.0
  %v446 = vmax.f32 %v430, 0.0
  %v447 = vmax.f32 %v431, 0.0
  %v448 = vmax.f32 %v432, 0.0
  %v449 = vmax.f32 %v433, 0.0
  %v450 = vmax.f32 %v434, 0.0
  %v451 = vmax.f32 %v435, 0.0
  %v452 = vmax.f32 %v436, 0.0
  %v453 = vmax.f32 %v437, 0.0
  %v454 = vmax.f32 %v438, 0.0
  %v455 = vmax.f32 %v439, 0.0
  %v456 = vmax.f32 %v440, 0.0
  %v457 = vmax.f32 %v441, 0.0
  %v458 = vmax.f32 %v442, 0.0
  %v459 = vmax.f32 %v443, 0.0
  %v460 = vmax.f32 %v444, 0.0
  %vm461 = vcmask 64512
  %462 = vst.msk [vmem:[%s5] sm:$0xff] %vm461, %v445
  %463 = vst.msk [vmem:[%s5 + $0x8] sm:$0xff] %vm461, %v446
  %464 = vst.msk [vmem:[%s5 + $0x10] sm:$0xff] %vm461, %v447
  %465 = vst.msk [vmem:[%s5 + $0x18] sm:$0xff] %vm461, %v448
  %466 = vst.msk [vmem:[%s5 + $0x20] sm:$0xff] %vm461, %v449
  %467 = vst.msk [vmem:[%s5 + $0x28] sm:$0xff] %vm461, %v450
  %468 = vst.msk [vmem:[%s5 + $0x30] sm:$0xff] %vm461, %v451
  %469 = vst.msk [vmem:[%s5 + $0x38] sm:$0xff] %vm461, %v452
  %470 = vst.msk [vmem:[%s5 + $0x40] sm:$0xff] %vm461, %v453
  %471 = vst.msk [vmem:[%s5 + $0x48] sm:$0xff] %vm461, %v454
  %472 = vst.msk [vmem:[%s5 + $0x50] sm:$0xff] %vm461, %v455
  %473 = vst.msk [vmem:[%s5 + $0x58] sm:$0xff] %vm461, %v456
  %474 = vst.msk [vmem:[%s5 + $0x60] sm:$0xff] %vm461, %v457
  %475 = vst.msk [vmem:[%s5 + $0x68] sm:$0xff] %vm461, %v458
  %476 = vst.msk [vmem:[%s5 + $0x70] sm:$0xff] %vm461, %v459
  %477 = vst.msk [vmem:[%s5 + $0x78] sm:$0xff] %vm461, %v460
  // Predicated region
  $region22: #{residual_block_forward.3} parent=0 // pred_check
    _
  $region23: #{residual_block_forward.3} parent=0 // pred_check_branch
    %479 = sbr.rel (0) target = $region25
  $region24: #{residual_block_forward.3} parent=0 // pred_region
    _
  $region25: #{residual_block_forward.3} parent=0 // pred_fallthru
    _
  // Predicated region
  $region26: #{residual_block_forward.3} parent=0 // pred_check
    _
  $region27: #{residual_block_forward.3} parent=0 // pred_check_branch
    %481 = sbr.rel (0) target = $region29
  $region28: #{residual_block_forward.3} parent=0 // pred_region
    _
  $region29: #{residual_block_forward.3} parent=0 // pred_fallthru
    _

</llo_original>
